<compile_context>
chip_gen: v7x
topology: tpu7x:2x2x1
jax: 0.10.0
libtpu: 0.0.40
codegen_flags: <defaults>
</compile_context>

<pallas_src>
import functools

import jax
import jax.numpy as jnp
from jax.experimental import pallas as pl
from jax.experimental.pallas import tpu as pltpu


def _embed_head_kernel(*refs, n_layers, n_full, chunk, rem):
    if n_layers == 0:                    # PassLayer head: pooled sum only
        h_ref, o_ref, acc_ref = refs
        w_ref = b_ref = None
    else:
        h_ref, w_ref, b_ref, o_ref, acc_ref = refs

    s = pl.program_id(1)

    @pl.when(s == 0)
    def _init():
        acc_ref[...] = jnp.zeros_like(acc_ref)

    # Streaming partial-sum accumulation over the time axis
    # (torch.sum(embeddings, dim=1)).  Each chunk is a pure elementwise
    # widen+add of a (tb, chunk, D) slice of the native-dtype hidden tile into
    # the fp32 (tb, chunk, D) accumulator -- no full-tile f32 temp and no
    # per-step cross-sublane reduce (VALU-only hot loop; the sublane collapse
    # happens once, in the finalize block below).
    for c in range(n_full):
        acc_ref[...] += h_ref[:, c * chunk:(c + 1) * chunk, :].astype(jnp.float32)
    if rem:
        # Only for odd full-extent sequence tiles (ts % chunk != 0): masked
        # partial-sublane accumulate of the tail rows.
        acc_ref[:, :rem, :] += h_ref[:, n_full * chunk:, :].astype(jnp.float32)

    @pl.when(s == pl.num_programs(1) - 1)
    def _finalize():
        x = jnp.sum(acc_ref[...], axis=1)           # (tb, D) fp32 pooled sum
        for l in range(n_layers):                   # static unroll of the head
            x = jnp.maximum(x, 0.0)                 # ReLU
            x = jnp.dot(x.astype(jnp.bfloat16), w_ref[l],   # bf16 MXU, fp32 acc
                        preferred_element_type=jnp.float32) + b_ref[l]
        o_ref[...] = x.astype(o_ref.dtype)


def _default_vmem_limit_bytes():
    # Size the scoped-VMEM limit from physical VMEM: v5e/v6e 128 MiB -> 96 MiB,
    # v7x 64 MiB/TC -> 48 MiB.  Capped at 100 MiB to leave Mosaic headroom.
    cap = 128 * 1024 * 1024
    try:
        cap = int(pltpu.get_tpu_info().vmem_capacity_bytes)
    except Exception:
        pass
    return min((cap * 3) // 4, 100 * 1024 * 1024)


def _pick_batch_tile(B, target=128):
    """Largest batch tile <= target dividing B and a multiple of 8 (sublane
    requirement of the (tb, D) output block), or the full extent."""
    if B <= target:
        return B
    for cand in range(target, 7, -1):
        if B % cand == 0 and cand % 8 == 0:
            return cand
    # TODO(synk): ragged B (no 8-aligned divisor) should be padded upstream in
    # prepare_halfbatch (or handled with a masked final tile).
    return B


def _pick_seq_tile(S, tb, D, itemsize, vmem_budget):
    """Sequence (reduction-axis) tile: a multiple of the dtype's minimum
    sublane tile (16 for bf16, 8 for f32) or the full extent, sized so the
    double-buffered hidden block uses at most ~half of the scoped-VMEM
    budget (leaving room for head weights, accumulator, output, headroom)."""
    sub = 16 if itemsize <= 2 else 8
    per_buffer = max(1, vmem_budget // 4)            # 2 buffers <= budget / 2
    max_ts = per_buffer // max(1, tb * D * itemsize)
    max_ts = max(sub, (max_ts // sub) * sub)
    if S <= max_ts:
        return S
    for cand in range(max_ts, sub - 1, -sub):
        if S % cand == 0:
            return cand
    # TODO(synk): pad S upstream to a multiple of 16 for better tiling.
    return S


def embed_branch(hidden, w, b, *, tb=None, ts=None, vmem_limit_bytes=None):
    """hidden: [B, S, D], streamed in its native dtype (f32 or bf16);
    w: [L, D, D] pre-transposed to (in, out); b: [L, 1, D].

    Returns sum-pooled + headed embeddings [B, D] float32 (fp32 float_mode)."""
    B, S, D = hidden.shape
    L = w.shape[0]

    if vmem_limit_bytes is None:
        vmem_limit_bytes = _default_vmem_limit_bytes()

    itemsize = jnp.dtype(hidden.dtype).itemsize
    tb = _pick_batch_tile(B) if tb is None else tb
    ts = _pick_seq_tile(S, tb, D, itemsize, vmem_limit_bytes) if ts is None else ts
    assert B % tb == 0 and S % ts == 0, (B, tb, S, ts)

    chunk = min(8, ts)                    # partial-sum accumulator depth
    n_full, rem = divmod(ts, chunk)

    kernel = functools.partial(_embed_head_kernel, n_layers=L,
                               n_full=n_full, chunk=chunk, rem=rem)

    hid_spec = pl.BlockSpec((tb, ts, D), lambda i, s: (i, s, 0))
    out_spec = pl.BlockSpec((tb, D), lambda i, s: (i, 0))
    if L == 0:
        operands = (hidden,)
        in_specs = [hid_spec]
    else:
        # Head weights are tiny vs the hidden stream: bf16 weights feed the
        # MXU (fp32 bias + accumulation).  Grid-invariant -> single-buffered
        # so they sit in VMEM once (matters inside v7x's 48 MiB budget).
        w = w.astype(jnp.bfloat16)
        b = b.astype(jnp.float32)
        w_spec = pl.BlockSpec((L, D, D), lambda i, s: (0, 0, 0),
                              pipeline_mode=pl.Buffered(1))
        b_spec = pl.BlockSpec((L, 1, D), lambda i, s: (0, 0, 0),
                              pipeline_mode=pl.Buffered(1))
        operands = (hidden, w, b)
        in_specs = [hid_spec, w_spec, b_spec]

    return pl.pallas_call(
        kernel,
        out_shape=jax.ShapeDtypeStruct((B, D), jnp.float32),
        grid_spec=pltpu.PrefetchScalarGridSpec(
            num_scalar_prefetch=0,
            grid=(B // tb, S // ts),
            in_specs=in_specs,
            out_specs=out_spec,
            scratch_shapes=[pltpu.VMEM((tb, chunk, D), jnp.float32)],
        ),
        compiler_params=pltpu.CompilerParams(
            # Batch axis shards across TensorCores (megacore / v7x); sequence
            # axis is the streaming reduction.  If profiling shows one TC idle
            # on v7x, switch axis 0 to pltpu.CORE_PARALLEL.
            dimension_semantics=("parallel", "arbitrary"),
            vmem_limit_bytes=vmem_limit_bytes,
        ),
    )(*operands)


def make_linear_head_params(key, n_layers, n_dim):
    """Deterministic synthetic init matching torch.nn.Linear shapes.

    Returns (w [L, D, D] already transposed to (in, out), b [L, 1, D])."""
    if n_layers == 0:
        return (jnp.zeros((0, n_dim, n_dim), jnp.float32),
                jnp.zeros((0, 1, n_dim), jnp.float32))
    bound = 1.0 / (n_dim ** 0.5)
    kw, kb = jax.random.split(key)
    w = jax.random.uniform(kw, (n_layers, n_dim, n_dim), jnp.float32, -bound, bound)
    b = jax.random.uniform(kb, (n_layers, 1, n_dim), jnp.float32, -bound, bound)
    return w, b


def head_params_from_torch_layout(torch_weights, torch_biases):
    """Real nn.Linear checkpoints store weight as (out, in); transpose each to
    the (in, out) layout the kernel expects and stack to [L, D, D] / [L, 1, D]."""
    w = jnp.stack([jnp.asarray(wi).T for wi in torch_weights])
    b = jnp.stack([jnp.asarray(bi).reshape(1, -1) for bi in torch_biases])
    return w, b


def reference_branch(hidden, w, b):
    """Pure-JAX reference of the same math (native-dtype hidden, fp32 time-axis
    sum, bf16 head matmuls with fp32 accumulation)."""
    x = jnp.sum(hidden.astype(jnp.float32), axis=1)
    for l in range(w.shape[0]):
        x = jnp.maximum(x, 0.0)
        x = jnp.dot(x.astype(jnp.bfloat16), w[l].astype(jnp.bfloat16),
                    preferred_element_type=jnp.float32) + b[l].astype(jnp.float32)
    return x


@jax.jit
def embedder_model_forward(q_hidden, a_hidden, q_params, a_params):
    """EmbedderModel.forward: (qembedd(quests), aembedd(answs)).

    TODO(synk): the two branches could be fused into a single pallas_call
    (stacked batch + scalar-prefetched branch id selecting head weights);
    under jit XLA is already free to overlap the two independent calls."""
    q_out = embed_branch(q_hidden, *q_params)
    a_out = embed_branch(a_hidden, *a_params)
    return q_out, a_out


if __name__ == "__main__":
    B, S, D = 16, 8, 128          # small test shapes; real model: S<=512, D=768
    HEAD_LAYERS = 4               # make_linear_head default n_layers=4

    key = jax.random.PRNGKey(0)
    k_qh, k_ah, k_qw, k_aw = jax.random.split(key, 4)

    # synthetic "last hidden state" outputs of qembedder / aembedder,
    # streamed into the kernel in their native dtype (no wrapper-side cast).
    q_hidden = jax.random.normal(k_qh, (B, S, D), jnp.float32)
    a_hidden = jax.random.normal(k_ah, (B, S, D), jnp.float32)

    q_params = make_linear_head_params(k_qw, HEAD_LAYERS, D)
    a_params = make_linear_head_params(k_aw, HEAD_LAYERS, D)

    q_out, a_out = embedder_model_forward(q_hidden, a_hidden, q_params, a_params)
    jax.block_until_ready((q_out, a_out))

    # correctness check against a pure-JAX reference of the same math
    q_ref = reference_branch(q_hidden, *q_params)
    a_ref = reference_branch(a_hidden, *a_params)
    assert q_out.shape == (B, D) and a_out.shape == (B, D)
    assert q_out.dtype == jnp.float32
    assert jnp.allclose(q_out, q_ref, atol=2e-2, rtol=2e-2)
    assert jnp.allclose(a_out, a_ref, atol=2e-2, rtol=2e-2)

    # PassLayer head (head_lays == 0): pooled sum only (fp32, near-exact).
    p_params = make_linear_head_params(k_qw, 0, D)
    p_out = embed_branch(q_hidden, *p_params)
    jax.block_until_ready(p_out)
    p_ref = reference_branch(q_hidden, *p_params)
    assert jnp.allclose(p_out, p_ref, atol=1e-4, rtol=1e-4)

    # bf16 backbone output path (native bf16 streaming, fp32 accumulation).
    q_hidden_bf16 = q_hidden.astype(jnp.bfloat16)
    b_out = embed_branch(q_hidden_bf16, *q_params)
    jax.block_until_ready(b_out)
    b_ref = reference_branch(q_hidden_bf16, *q_params)
    assert jnp.allclose(b_out, b_ref, atol=2e-2, rtol=2e-2)

    print("KERNEL_OK")
</pallas_src>

<mosaic_0001>
module attributes {stable_mosaic.version = 11 : i64} {
  func.func @_embed_head_kernel(%arg0: i32, %arg1: i32, %arg2: memref<16x8x128xf32, #tpu.memory_space<vmem>>, %arg3: memref<4x128x128xbf16, #tpu.memory_space<vmem>>, %arg4: memref<4x1x128xf32, #tpu.memory_space<vmem>>, %arg5: memref<16x128xf32, #tpu.memory_space<vmem>>, %arg6: memref<16x8x128xf32, #tpu.memory_space<vmem>>) attributes {dimension_semantics = [#tpu.dimension_semantics<parallel>, #tpu.dimension_semantics<arbitrary>], iteration_bounds = array<i64: 1, 1>, scalar_prefetch = 0 : i64, scratch_operands = 1 : i64, tpu.core_type = #tpu.core_type<tc>, window_params = [{transform_indices = @transform_0, window_bounds = array<i64: 16, 8, 128>}, {pipeline_mode = #tpu.pipeline_mode<synchronous>, transform_indices = @transform_1, window_bounds = array<i64: 4, 128, 128>}, {pipeline_mode = #tpu.pipeline_mode<synchronous>, transform_indices = @transform_2, window_bounds = array<i64: 4, 1, 128>}, {transform_indices = @transform_3, window_bounds = array<i64: 16, 128>}]} {
    %c0_i32 = arith.constant 0 : i32
    %0 = arith.cmpi eq, %arg1, %c0_i32 : i32
    %1 = arith.extui %0 : i1 to i32
    %c0_i32_0 = arith.constant 0 : i32
    %2 = arith.cmpi ne, %1, %c0_i32_0 : i32
    scf.if %2 {
      %cst = arith.constant 0.000000e+00 : f32
      %10 = vector.broadcast %cst : f32 to vector<16x8x128xf32>
      %c0_11 = arith.constant 0 : index
      %c0_12 = arith.constant 0 : index
      %c0_13 = arith.constant 0 : index
      %11 = vector.load %arg6[%c0_11, %c0_12, %c0_13] : memref<16x8x128xf32, #tpu.memory_space<vmem>>, vector<16x8x128xf32>
      tpu.vector_store %arg6[%c0_11, %c0_12, %c0_13], %10 {strides = array<i32>} : memref<16x8x128xf32, #tpu.memory_space<vmem>>, vector<16x8x128xf32>,
    } else {
    }
    %c0 = arith.constant 0 : index
    %c0_1 = arith.constant 0 : index
    %c0_2 = arith.constant 0 : index
    %3 = vector.load %arg6[%c0, %c0_1, %c0_2] : memref<16x8x128xf32, #tpu.memory_space<vmem>>, vector<16x8x128xf32>
    %c0_3 = arith.constant 0 : index
    %c0_4 = arith.constant 0 : index
    %c0_5 = arith.constant 0 : index
    %4 = vector.load %arg2[%c0_3, %c0_4, %c0_5] : memref<16x8x128xf32, #tpu.memory_space<vmem>>, vector<16x8x128xf32>
    %5 = arith.addf %3, %4 : vector<16x8x128xf32>
    %c0_6 = arith.constant 0 : index
    %c0_7 = arith.constant 0 : index
    %c0_8 = arith.constant 0 : index
    %6 = vector.load %arg6[%c0_6, %c0_7, %c0_8] : memref<16x8x128xf32, #tpu.memory_space<vmem>>, vector<16x8x128xf32>
    tpu.vector_store %arg6[%c0_6, %c0_7, %c0_8], %5 {strides = array<i32>} : memref<16x8x128xf32, #tpu.memory_space<vmem>>, vector<16x8x128xf32>,
    %c0_i32_9 = arith.constant 0 : i32
    %7 = arith.cmpi eq, %arg1, %c0_i32_9 : i32
    %8 = arith.extui %7 : i1 to i32
    %c0_i32_10 = arith.constant 0 : i32
    %9 = arith.cmpi ne, %8, %c0_i32_10 : i32
    scf.if %9 {
      %c0_11 = arith.constant 0 : index
      %c0_12 = arith.constant 0 : index
      %c0_13 = arith.constant 0 : index
      %10 = vector.load %arg6[%c0_11, %c0_12, %c0_13] : memref<16x8x128xf32, #tpu.memory_space<vmem>>, vector<16x8x128xf32>
      %cst = arith.constant dense<0.000000e+00> : vector<16x128xf32>
      %11 = vector.multi_reduction <add>, %10, %cst [1] : vector<16x8x128xf32> to vector<16x128xf32>
      %cst_14 = arith.constant 0.000000e+00 : f32
      %12 = vector.broadcast %cst_14 : f32 to vector<16x128xf32>
      %13 = arith.maximumf %11, %12 : vector<16x128xf32>
      %14 = arith.truncf %13 : vector<16x128xf32> to vector<16x128xbf16>
      %c0_15 = arith.constant 0 : index
      %c0_16 = arith.constant 0 : index
      %c0_17 = arith.constant 0 : index
      %15 = vector.load %arg3[%c0_15, %c0_16, %c0_17] : memref<4x128x128xbf16, #tpu.memory_space<vmem>>, vector<1x128x128xbf16>
      %16 = vector.shape_cast %15 : vector<1x128x128xbf16> to vector<128x128xbf16>
      %cst_18 = arith.constant dense<0.000000e+00> : vector<16x128xf32>
      %17 = tpu.matmul %14, %16, %cst_18 {dimension_numbers = #tpu.dot_dimension_numbers<[1], [0], [0], [1], [0, 0, 1, 1], [], []>} : vector<16x128xbf16>, vector<128x128xbf16>, vector<16x128xf32> -> vector<16x128xf32>
      %c0_19 = arith.constant 0 : index
      %c0_20 = arith.constant 0 : index
      %c0_21 = arith.constant 0 : index
      %18 = vector.load %arg4[%c0_19, %c0_20, %c0_21] : memref<4x1x128xf32, #tpu.memory_space<vmem>>, vector<1x1x128xf32>
      %19 = vector.shape_cast %18 : vector<1x1x128xf32> to vector<1x128xf32>
      %20 = vector.broadcast %19 : vector<1x128xf32> to vector<16x128xf32>
      %21 = arith.addf %17, %20 : vector<16x128xf32>
      %cst_22 = arith.constant 0.000000e+00 : f32
      %22 = vector.broadcast %cst_22 : f32 to vector<16x128xf32>
      %23 = arith.maximumf %21, %22 : vector<16x128xf32>
      %24 = arith.truncf %23 : vector<16x128xf32> to vector<16x128xbf16>
      %c1 = arith.constant 1 : index
      %c0_23 = arith.constant 0 : index
      %c0_24 = arith.constant 0 : index
      %25 = vector.load %arg3[%c1, %c0_23, %c0_24] : memref<4x128x128xbf16, #tpu.memory_space<vmem>>, vector<1x128x128xbf16>
      %26 = vector.shape_cast %25 : vector<1x128x128xbf16> to vector<128x128xbf16>
      %cst_25 = arith.constant dense<0.000000e+00> : vector<16x128xf32>
      %27 = tpu.matmul %24, %26, %cst_25 {dimension_numbers = #tpu.dot_dimension_numbers<[1], [0], [0], [1], [0, 0, 1, 1], [], []>} : vector<16x128xbf16>, vector<128x128xbf16>, vector<16x128xf32> -> vector<16x128xf32>
      %c1_26 = arith.constant 1 : index
      %c0_27 = arith.constant 0 : index
      %c0_28 = arith.constant 0 : index
      %28 = vector.load %arg4[%c1_26, %c0_27, %c0_28] : memref<4x1x128xf32, #tpu.memory_space<vmem>>, vector<1x1x128xf32>
      %29 = vector.shape_cast %28 : vector<1x1x128xf32> to vector<1x128xf32>
      %30 = vector.broadcast %29 : vector<1x128xf32> to vector<16x128xf32>
      %31 = arith.addf %27, %30 : vector<16x128xf32>
      %cst_29 = arith.constant 0.000000e+00 : f32
      %32 = vector.broadcast %cst_29 : f32 to vector<16x128xf32>
      %33 = arith.maximumf %31, %32 : vector<16x128xf32>
      %34 = arith.truncf %33 : vector<16x128xf32> to vector<16x128xbf16>
      %c2 = arith.constant 2 : index
      %c0_30 = arith.constant 0 : index
      %c0_31 = arith.constant 0 : index
      %35 = vector.load %arg3[%c2, %c0_30, %c0_31] : memref<4x128x128xbf16, #tpu.memory_space<vmem>>, vector<1x128x128xbf16>
      %36 = vector.shape_cast %35 : vector<1x128x128xbf16> to vector<128x128xbf16>
      %cst_32 = arith.constant dense<0.000000e+00> : vector<16x128xf32>
      %37 = tpu.matmul %34, %36, %cst_32 {dimension_numbers = #tpu.dot_dimension_numbers<[1], [0], [0], [1], [0, 0, 1, 1], [], []>} : vector<16x128xbf16>, vector<128x128xbf16>, vector<16x128xf32> -> vector<16x128xf32>
      %c2_33 = arith.constant 2 : index
      %c0_34 = arith.constant 0 : index
      %c0_35 = arith.constant 0 : index
      %38 = vector.load %arg4[%c2_33, %c0_34, %c0_35] : memref<4x1x128xf32, #tpu.memory_space<vmem>>, vector<1x1x128xf32>
      %39 = vector.shape_cast %38 : vector<1x1x128xf32> to vector<1x128xf32>
      %40 = vector.broadcast %39 : vector<1x128xf32> to vector<16x128xf32>
      %41 = arith.addf %37, %40 : vector<16x128xf32>
      %cst_36 = arith.constant 0.000000e+00 : f32
      %42 = vector.broadcast %cst_36 : f32 to vector<16x128xf32>
      %43 = arith.maximumf %41, %42 : vector<16x128xf32>
      %44 = arith.truncf %43 : vector<16x128xf32> to vector<16x128xbf16>
      %c3 = arith.constant 3 : index
      %c0_37 = arith.constant 0 : index
      %c0_38 = arith.constant 0 : index
      %45 = vector.load %arg3[%c3, %c0_37, %c0_38] : memref<4x128x128xbf16, #tpu.memory_space<vmem>>, vector<1x128x128xbf16>
      %46 = vector.shape_cast %45 : vector<1x128x128xbf16> to vector<128x128xbf16>
      %cst_39 = arith.constant dense<0.000000e+00> : vector<16x128xf32>
      %47 = tpu.matmul %44, %46, %cst_39 {dimension_numbers = #tpu.dot_dimension_numbers<[1], [0], [0], [1], [0, 0, 1, 1], [], []>} : vector<16x128xbf16>, vector<128x128xbf16>, vector<16x128xf32> -> vector<16x128xf32>
      %c3_40 = arith.constant 3 : index
      %c0_41 = arith.constant 0 : index
      %c0_42 = arith.constant 0 : index
      %48 = vector.load %arg4[%c3_40, %c0_41, %c0_42] : memref<4x1x128xf32, #tpu.memory_space<vmem>>, vector<1x1x128xf32>
      %49 = vector.shape_cast %48 : vector<1x1x128xf32> to vector<1x128xf32>
      %50 = vector.broadcast %49 : vector<1x128xf32> to vector<16x128xf32>
      %51 = arith.addf %47, %50 : vector<16x128xf32>
      %c0_43 = arith.constant 0 : index
      %c0_44 = arith.constant 0 : index
      %52 = vector.load %arg5[%c0_43, %c0_44] : memref<16x128xf32, #tpu.memory_space<vmem>>, vector<16x128xf32>
      tpu.vector_store %arg5[%c0_43, %c0_44], %51 {strides = array<i32>} : memref<16x128xf32, #tpu.memory_space<vmem>>, vector<16x128xf32>,
    } else {
    }
    return
  }
  func.func @transform_0(%arg0: i32, %arg1: i32) -> (i32, i32, i32) {
    %c0_i32 = arith.constant 0 : i32
    %c0_i32_0 = arith.constant 0 : i32
    return %arg0, %arg1, %c0_i32 : i32, i32, i32
  }
  func.func @transform_1(%arg0: i32, %arg1: i32) -> (i32, i32, i32) {
    %c0_i32 = arith.constant 0 : i32
    %c0_i32_0 = arith.constant 0 : i32
    %c0_i32_1 = arith.constant 0 : i32
    %c0_i32_2 = arith.constant 0 : i32
    return %c0_i32, %c0_i32_0, %c0_i32_1 : i32, i32, i32
  }
  func.func @transform_2(%arg0: i32, %arg1: i32) -> (i32, i32, i32) {
    %c0_i32 = arith.constant 0 : i32
    %c0_i32_0 = arith.constant 0 : i32
    %c0_i32_1 = arith.constant 0 : i32
    %c0_i32_2 = arith.constant 0 : i32
    return %c0_i32, %c0_i32_0, %c0_i32_1 : i32, i32, i32
  }
  func.func @transform_3(%arg0: i32, %arg1: i32) -> (i32, i32) {
    %c0_i32 = arith.constant 0 : i32
    %c0_i32_0 = arith.constant 0 : i32
    return %arg0, %c0_i32 : i32, i32
  }
}

</mosaic_0001>

<llo_original>
// kernel: embedder_model_forward.2
$region0: #{embedder_model_forward.2}
  #allocation0 [shape = 'u32[]', space=smem, size = 0x4, offset = 0x4, fixed_abs, tag = 'smem constant byte address 0x4 - core index']
  #allocation1 [shape = 'u32[144,128]{1,0:T(1,128)}', space=vmem, size = 0x12000, scoped, tag = 'internal scratch']
  #allocation2 [shape = 'f32[16,8,128]{2,1,0:T(8,128)}', space=vmem, size = 0x10000, scoped, tag = 'scratch operand']
  %s0 = inlined_call_operand.hbm [shape: f32[16,8,128], index: 0, kind: input, shape index: {}]
  %s1 = inlined_call_operand.hbm [shape: bf16[4,128,128], index: 1, kind: input, shape index: {}]
  %s2 = inlined_call_operand.hbm [shape: f32[4,1,128], index: 2, kind: input, shape index: {}]
  %s3 = inlined_call_operand.hbm [shape: f32[16,128], index: 3, kind: output, shape index: {}]
  %s4 = sld [smem:[#allocation0]]
  $region42: #{embedder_model_forward.2} parent=0
    _
  %s6 = ssub.s32 1, %s4
  %s7 = scalar_select 0, %s6, %s4
  $region1: #{embedder_model_forward.2} parent=0
    #allocation3 [shape = 'u8[65536]{0}', space=vmem, size = 0x10000, scoped, tag = 'input window, operand 0, single buffered']
    #allocation4 [shape = 's32[1]{0}', space=sflag, size = 0x4, scoped, tag = 'scoped memory for embedder_model_forward.2']
    #allocation5 [shape = 's32[1]{0}', space=sflag, size = 0x4, scoped, tag = 'scoped memory for embedder_model_forward.2']
    #allocation6 [shape = 'u8[131072]{0}', space=vmem, size = 0x20000, scoped, tag = 'input window, operand 1, single buffered']
    #allocation7 [shape = 's32[1]{0}', space=sflag, size = 0x4, scoped, tag = 'scoped memory for embedder_model_forward.2']
    #allocation8 [shape = 'u8[2048]{0}', space=vmem, size = 0x800, scoped, tag = 'input window, operand 2, single buffered']
    #allocation9 [shape = 'u8[8192]{0}', space=vmem, size = 0x2000, scoped, tag = 'output window, operand 0, single buffered']
    %8 = vsyncpa [#allocation4], 0
    %9 = vsyncpa [#allocation7], 0
    %10 = vsyncpa [#allocation5], 0
    // Predicated region
    $region2: #{embedder_model_forward.2} parent=1 // pred_check
      _
    $region3: #{embedder_model_forward.2} parent=1 // pred_check_branch
      %12 = sbr.rel (0) target = $region5
    $region4: #{embedder_model_forward.2} parent=1 // pred_region
      %s14 = ssub.s32 2048, 2048
      %15 = vsyncadd [#allocation4], %s14
      %s16 = sshll.u32 [#allocation3], 4
      %s17 = int_to_ptr.vmem [resolvable:$true] %s16
      %22 = dma.hbm_to_vmem [thread:$0]  %s0, 2048, %s17, [#allocation4], 128, 128, 8
    $region5: #{embedder_model_forward.2} parent=1 // pred_fallthru
      _
    // Predicated region
    $region6: #{embedder_model_forward.2} parent=1 // pred_check
      _
    $region7: #{embedder_model_forward.2} parent=1 // pred_check_branch
      %24 = sbr.rel (0) target = $region9
    $region8: #{embedder_model_forward.2} parent=1 // pred_region
      %s26 = ssub.s32 4096, 4096
      %27 = vsyncadd [#allocation7], %s26
      %s28 = sshll.u32 [#allocation6], 4
      %s29 = int_to_ptr.vmem [resolvable:$true] %s28
      %34 = dma.hbm_to_vmem [thread:$0]  %s1, 4096, %s29, [#allocation7], 64, 64, 4
    $region9: #{embedder_model_forward.2} parent=1 // pred_fallthru
      _
    // Predicated region
    $region10: #{embedder_model_forward.2} parent=1 // pred_check
      _
    $region11: #{embedder_model_forward.2} parent=1 // pred_check_branch
      %36 = sbr.rel (0) target = $region13
    $region12: #{embedder_model_forward.2} parent=1 // pred_region
      %s38 = ssub.s32 64, 64
      %39 = vsyncadd [#allocation7], %s38
      %s40 = sshll.u32 [#allocation8], 4
      %s41 = int_to_ptr.vmem [resolvable:$true] %s40
      %46 = dma.hbm_to_vmem [thread:$0]  %s2, 64, %s41, [#allocation7], 16, 16, 1
    $region13: #{embedder_model_forward.2} parent=1 // pred_fallthru
      _
    // Predicated region
    $region14: #{embedder_model_forward.2} parent=1 // pred_check
      _
    $region15: #{embedder_model_forward.2} parent=1 // pred_check_branch
      %48 = sbr.rel (0) target = $region17
    $region16: #{embedder_model_forward.2} parent=1 // pred_region
      %49 = dma.done [#allocation4], 2048
    $region17: #{embedder_model_forward.2} parent=1 // pred_fallthru
      _
    // Predicated region
    $region18: #{embedder_model_forward.2} parent=1 // pred_check
      _
    $region19: #{embedder_model_forward.2} parent=1 // pred_check_branch
      %51 = sbr.rel (0) target = $region21
    $region20: #{embedder_model_forward.2} parent=1 // pred_region
      %52 = dma.done [#allocation7], 4096
    $region21: #{embedder_model_forward.2} parent=1 // pred_fallthru
      _
    // Predicated region
    $region22: #{embedder_model_forward.2} parent=1 // pred_check
      _
    $region23: #{embedder_model_forward.2} parent=1 // pred_check_branch
      %54 = sbr.rel (0) target = $region25
    $region24: #{embedder_model_forward.2} parent=1 // pred_region
      %55 = dma.done [#allocation7], 64
    $region25: #{embedder_model_forward.2} parent=1 // pred_fallthru
      _
    %p57 = scmp.eq.s32.totalorder 0, 0
    // Predicated region
    $region26: #{embedder_model_forward.2} parent=1 // pred_check
      %p58 = pneg %p57
    $region27: #{embedder_model_forward.2} parent=1 // pred_check_branch
      %60 = sbr.rel (%p58) target = $region29
    $region28: #{embedder_model_forward.2} parent=1 // pred_region
      %61 = vst [vmem:[#allocation2] sm:$0xff] 0.0
      %62 = vst [vmem:[#allocation2 + $0x8] sm:$0xff] 0.0
      %63 = vst [vmem:[#allocation2 + $0x10] sm:$0xff] 0.0
      %64 = vst [vmem:[#allocation2 + $0x18] sm:$0xff] 0.0
      %65 = vst [vmem:[#allocation2 + $0x20] sm:$0xff] 0.0
      %66 = vst [vmem:[#allocation2 + $0x28] sm:$0xff] 0.0
      %67 = vst [vmem:[#allocation2 + $0x30] sm:$0xff] 0.0
      %68 = vst [vmem:[#allocation2 + $0x38] sm:$0xff] 0.0
      %69 = vst [vmem:[#allocation2 + $0x40] sm:$0xff] 0.0
      %70 = vst [vmem:[#allocation2 + $0x48] sm:$0xff] 0.0
      %71 = vst [vmem:[#allocation2 + $0x50] sm:$0xff] 0.0
      %72 = vst [vmem:[#allocation2 + $0x58] sm:$0xff] 0.0
      %73 = vst [vmem:[#allocation2 + $0x60] sm:$0xff] 0.0
      %74 = vst [vmem:[#allocation2 + $0x68] sm:$0xff] 0.0
      %75 = vst [vmem:[#allocation2 + $0x70] sm:$0xff] 0.0
      %76 = vst [vmem:[#allocation2 + $0x78] sm:$0xff] 0.0
    $region29: #{embedder_model_forward.2} parent=1 // pred_fallthru
      _
    %v77 = vld [vmem:[#allocation2] sm:$0xff]
    %v78 = vld [vmem:[#allocation2 + $0x8] sm:$0xff]
    %v79 = vld [vmem:[#allocation2 + $0x10] sm:$0xff]
    %v80 = vld [vmem:[#allocation2 + $0x18] sm:$0xff]
    %v81 = vld [vmem:[#allocation2 + $0x20] sm:$0xff]
    %v82 = vld [vmem:[#allocation2 + $0x28] sm:$0xff]
    %v83 = vld [vmem:[#allocation2 + $0x30] sm:$0xff]
    %v84 = vld [vmem:[#allocation2 + $0x38] sm:$0xff]
    %v85 = vld [vmem:[#allocation2 + $0x40] sm:$0xff]
    %v86 = vld [vmem:[#allocation2 + $0x48] sm:$0xff]
    %v87 = vld [vmem:[#allocation2 + $0x50] sm:$0xff]
    %v88 = vld [vmem:[#allocation2 + $0x58] sm:$0xff]
    %v89 = vld [vmem:[#allocation2 + $0x60] sm:$0xff]
    %v90 = vld [vmem:[#allocation2 + $0x68] sm:$0xff]
    %v91 = vld [vmem:[#allocation2 + $0x70] sm:$0xff]
    %v92 = vld [vmem:[#allocation2 + $0x78] sm:$0xff]
    %v93 = vld [vmem:[#allocation3] sm:$0xff]
    %v94 = vld [vmem:[#allocation3 + $0x8] sm:$0xff]
    %v95 = vld [vmem:[#allocation3 + $0x10] sm:$0xff]
    %v96 = vld [vmem:[#allocation3 + $0x18] sm:$0xff]
    %v97 = vld [vmem:[#allocation3 + $0x20] sm:$0xff]
    %v98 = vld [vmem:[#allocation3 + $0x28] sm:$0xff]
    %v99 = vld [vmem:[#allocation3 + $0x30] sm:$0xff]
    %v100 = vld [vmem:[#allocation3 + $0x38] sm:$0xff]
    %v101 = vld [vmem:[#allocation3 + $0x40] sm:$0xff]
    %v102 = vld [vmem:[#allocation3 + $0x48] sm:$0xff]
    %v103 = vld [vmem:[#allocation3 + $0x50] sm:$0xff]
    %v104 = vld [vmem:[#allocation3 + $0x58] sm:$0xff]
    %v105 = vld [vmem:[#allocation3 + $0x60] sm:$0xff]
    %v106 = vld [vmem:[#allocation3 + $0x68] sm:$0xff]
    %v107 = vld [vmem:[#allocation3 + $0x70] sm:$0xff]
    %v108 = vld [vmem:[#allocation3 + $0x78] sm:$0xff]
    %v109 = vadd.f32 %v77, %v93
    %v110 = vadd.f32 %v78, %v94
    %v111 = vadd.f32 %v79, %v95
    %v112 = vadd.f32 %v80, %v96
    %v113 = vadd.f32 %v81, %v97
    %v114 = vadd.f32 %v82, %v98
    %v115 = vadd.f32 %v83, %v99
    %v116 = vadd.f32 %v84, %v100
    %v117 = vadd.f32 %v85, %v101
    %v118 = vadd.f32 %v86, %v102
    %v119 = vadd.f32 %v87, %v103
    %v120 = vadd.f32 %v88, %v104
    %v121 = vadd.f32 %v89, %v105
    %v122 = vadd.f32 %v90, %v106
    %v123 = vadd.f32 %v91, %v107
    %v124 = vadd.f32 %v92, %v108
    %125 = vst [vmem:[#allocation2] sm:$0xff] %v109
    %126 = vst [vmem:[#allocation2 + $0x8] sm:$0xff] %v110
    %127 = vst [vmem:[#allocation2 + $0x10] sm:$0xff] %v111
    %128 = vst [vmem:[#allocation2 + $0x18] sm:$0xff] %v112
    %129 = vst [vmem:[#allocation2 + $0x20] sm:$0xff] %v113
    %130 = vst [vmem:[#allocation2 + $0x28] sm:$0xff] %v114
    %131 = vst [vmem:[#allocation2 + $0x30] sm:$0xff] %v115
    %132 = vst [vmem:[#allocation2 + $0x38] sm:$0xff] %v116
    %133 = vst [vmem:[#allocation2 + $0x40] sm:$0xff] %v117
    %134 = vst [vmem:[#allocation2 + $0x48] sm:$0xff] %v118
    %135 = vst [vmem:[#allocation2 + $0x50] sm:$0xff] %v119
    %136 = vst [vmem:[#allocation2 + $0x58] sm:$0xff] %v120
    %137 = vst [vmem:[#allocation2 + $0x60] sm:$0xff] %v121
    %138 = vst [vmem:[#allocation2 + $0x68] sm:$0xff] %v122
    %139 = vst [vmem:[#allocation2 + $0x70] sm:$0xff] %v123
    %140 = vst [vmem:[#allocation2 + $0x78] sm:$0xff] %v124
    // Predicated region
    $region30: #{embedder_model_forward.2} parent=1 // pred_check
      %p141 = pneg %p57
    $region31: #{embedder_model_forward.2} parent=1 // pred_check_branch
      %143 = sbr.rel (%p141) target = $region33
    $region32: #{embedder_model_forward.2} parent=1 // pred_region
      %v144 = vld [vmem:[#allocation2] sm:$0xff]
      %v145 = vld [vmem:[#allocation2 + $0x8] sm:$0xff]
      %v146 = vld [vmem:[#allocation2 + $0x10] sm:$0xff]
      %v147 = vld [vmem:[#allocation2 + $0x18] sm:$0xff]
      %v148 = vld [vmem:[#allocation2 + $0x20] sm:$0xff]
      %v149 = vld [vmem:[#allocation2 + $0x28] sm:$0xff]
      %v150 = vld [vmem:[#allocation2 + $0x30] sm:$0xff]
      %v151 = vld [vmem:[#allocation2 + $0x38] sm:$0xff]
      %v152 = vld [vmem:[#allocation2 + $0x40] sm:$0xff]
      %v153 = vld [vmem:[#allocation2 + $0x48] sm:$0xff]
      %v154 = vld [vmem:[#allocation2 + $0x50] sm:$0xff]
      %v155 = vld [vmem:[#allocation2 + $0x58] sm:$0xff]
      %v156 = vld [vmem:[#allocation2 + $0x60] sm:$0xff]
      %v157 = vld [vmem:[#allocation2 + $0x68] sm:$0xff]
      %v158 = vld [vmem:[#allocation2 + $0x70] sm:$0xff]
      %v159 = vld [vmem:[#allocation2 + $0x78] sm:$0xff]
      %v160 = vrot.slane %v144, 4
      %v161 = vadd.f32 %v144, %v160
      %v162 = vrot.slane %v161, 2
      %v163 = vadd.f32 %v161, %v162
      %v164 = vrot.slane %v163, 1
      %v165 = vadd.f32 %v163, %v164
      %v166 = vrot.slane %v145, 4
      %v167 = vadd.f32 %v145, %v166
      %v168 = vrot.slane %v167, 2
      %v169 = vadd.f32 %v167, %v168
      %v170 = vrot.slane %v169, 1
      %v171 = vadd.f32 %v169, %v170
      %v172 = vrot.slane %v146, 4
      %v173 = vadd.f32 %v146, %v172
      %v174 = vrot.slane %v173, 2
      %v175 = vadd.f32 %v173, %v174
      %v176 = vrot.slane %v175, 1
      %v177 = vadd.f32 %v175, %v176
      %v178 = vrot.slane %v147, 4
      %v179 = vadd.f32 %v147, %v178
      %v180 = vrot.slane %v179, 2
      %v181 = vadd.f32 %v179, %v180
      %v182 = vrot.slane %v181, 1
      %v183 = vadd.f32 %v181, %v182
      %v184 = vrot.slane %v148, 4
      %v185 = vadd.f32 %v148, %v184
      %v186 = vrot.slane %v185, 2
      %v187 = vadd.f32 %v185, %v186
      %v188 = vrot.slane %v187, 1
      %v189 = vadd.f32 %v187, %v188
      %v190 = vrot.slane %v149, 4
      %v191 = vadd.f32 %v149, %v190
      %v192 = vrot.slane %v191, 2
      %v193 = vadd.f32 %v191, %v192
      %v194 = vrot.slane %v193, 1
      %v195 = vadd.f32 %v193, %v194
      %v196 = vrot.slane %v150, 4
      %v197 = vadd.f32 %v150, %v196
      %v198 = vrot.slane %v197, 2
      %v199 = vadd.f32 %v197, %v198
      %v200 = vrot.slane %v199, 1
      %v201 = vadd.f32 %v199, %v200
      %v202 = vrot.slane %v151, 4
      %v203 = vadd.f32 %v151, %v202
      %v204 = vrot.slane %v203, 2
      %v205 = vadd.f32 %v203, %v204
      %v206 = vrot.slane %v205, 1
      %v207 = vadd.f32 %v205, %v206
      %v208 = vrot.slane %v152, 4
      %v209 = vadd.f32 %v152, %v208
      %v210 = vrot.slane %v209, 2
      %v211 = vadd.f32 %v209, %v210
      %v212 = vrot.slane %v211, 1
      %v213 = vadd.f32 %v211, %v212
      %v214 = vrot.slane %v153, 4
      %v215 = vadd.f32 %v153, %v214
      %v216 = vrot.slane %v215, 2
      %v217 = vadd.f32 %v215, %v216
      %v218 = vrot.slane %v217, 1
      %v219 = vadd.f32 %v217, %v218
      %v220 = vrot.slane %v154, 4
      %v221 = vadd.f32 %v154, %v220
      %v222 = vrot.slane %v221, 2
      %v223 = vadd.f32 %v221, %v222
      %v224 = vrot.slane %v223, 1
      %v225 = vadd.f32 %v223, %v224
      %v226 = vrot.slane %v155, 4
      %v227 = vadd.f32 %v155, %v226
      %v228 = vrot.slane %v227, 2
      %v229 = vadd.f32 %v227, %v228
      %v230 = vrot.slane %v229, 1
      %v231 = vadd.f32 %v229, %v230
      %v232 = vrot.slane %v156, 4
      %v233 = vadd.f32 %v156, %v232
      %v234 = vrot.slane %v233, 2
      %v235 = vadd.f32 %v233, %v234
      %v236 = vrot.slane %v235, 1
      %v237 = vadd.f32 %v235, %v236
      %v238 = vrot.slane %v157, 4
      %v239 = vadd.f32 %v157, %v238
      %v240 = vrot.slane %v239, 2
      %v241 = vadd.f32 %v239, %v240
      %v242 = vrot.slane %v241, 1
      %v243 = vadd.f32 %v241, %v242
      %v244 = vrot.slane %v158, 4
      %v245 = vadd.f32 %v158, %v244
      %v246 = vrot.slane %v245, 2
      %v247 = vadd.f32 %v245, %v246
      %v248 = vrot.slane %v247, 1
      %v249 = vadd.f32 %v247, %v248
      %v250 = vrot.slane %v159, 4
      %v251 = vadd.f32 %v159, %v250
      %v252 = vrot.slane %v251, 2
      %v253 = vadd.f32 %v251, %v252
      %v254 = vrot.slane %v253, 1
      %v255 = vadd.f32 %v253, %v254
      %v256 = vmax.f32 %v165, 0.0
      %v257 = vmax.f32 %v171, 0.0
      %v258 = vmax.f32 %v177, 0.0
      %v259 = vmax.f32 %v183, 0.0
      %v260 = vmax.f32 %v189, 0.0
      %v261 = vmax.f32 %v195, 0.0
      %v262 = vmax.f32 %v201, 0.0
      %v263 = vmax.f32 %v207, 0.0
      %v264 = vmax.f32 %v213, 0.0
      %v265 = vmax.f32 %v219, 0.0
      %v266 = vmax.f32 %v225, 0.0
      %v267 = vmax.f32 %v231, 0.0
      %v268 = vmax.f32 %v237, 0.0
      %v269 = vmax.f32 %v243, 0.0
      %v270 = vmax.f32 %v249, 0.0
      %v271 = vmax.f32 %v255, 0.0
      %v272 = vpack.c.bf16 %v256, %v256
      %v273 = vpack.c.bf16 %v257, %v257
      %v274 = vpack.c.bf16 %v258, %v258
      %v275 = vpack.c.bf16 %v259, %v259
      %v276 = vpack.c.bf16 %v260, %v260
      %v277 = vpack.c.bf16 %v261, %v261
      %v278 = vpack.c.bf16 %v262, %v262
      %v279 = vpack.c.bf16 %v263, %v263
      %v280 = vpack.c.bf16 %v264, %v264
      %v281 = vpack.c.bf16 %v265, %v265
      %v282 = vpack.c.bf16 %v266, %v266
      %v283 = vpack.c.bf16 %v267, %v267
      %v284 = vpack.c.bf16 %v268, %v268
      %v285 = vpack.c.bf16 %v269, %v269
      %v286 = vpack.c.bf16 %v270, %v270
      %v287 = vpack.c.bf16 %v271, %v271
      %v288 = vld [vmem:[#allocation6] sm:$0xf]
      %v289 = vld [vmem:[#allocation6 + $0x4] sm:$0xf]
      %v290 = vld [vmem:[#allocation6 + $0x8] sm:$0xf]
      %v291 = vld [vmem:[#allocation6 + $0xc] sm:$0xf]
      %v292 = vld [vmem:[#allocation6 + $0x10] sm:$0xf]
      %v293 = vld [vmem:[#allocation6 + $0x14] sm:$0xf]
      %v294 = vld [vmem:[#allocation6 + $0x18] sm:$0xf]
      %v295 = vld [vmem:[#allocation6 + $0x1c] sm:$0xf]
      %v296 = vld [vmem:[#allocation6 + $0x20] sm:$0xf]
      %v297 = vld [vmem:[#allocation6 + $0x24] sm:$0xf]
      %v298 = vld [vmem:[#allocation6 + $0x28] sm:$0xf]
      %v299 = vld [vmem:[#allocation6 + $0x2c] sm:$0xf]
      %v300 = vld [vmem:[#allocation6 + $0x30] sm:$0xf]
      %v301 = vld [vmem:[#allocation6 + $0x34] sm:$0xf]
      %v302 = vld [vmem:[#allocation6 + $0x38] sm:$0xf]
      %v303 = vld [vmem:[#allocation6 + $0x3c] sm:$0xf]
      %v304 = vld [vmem:[#allocation8] sm:$0x1]
      %v306 = vlaneseq
      %v307 = vshrl.u32 %v306, 7
      %v308 = vsub.s32 0, %v307
      %v309 = vrot.slane %v304, %v308
      %v327 = vunpack.c.l.b16 %v272
      %v328 = vunpack.c.l.b16 %v273
      %v329 = vunpack.c.l.b16 %v274
      %v330 = vunpack.c.l.b16 %v275
      %v331 = vunpack.c.l.b16 %v276
      %v332 = vunpack.c.l.b16 %v277
      %v333 = vunpack.c.l.b16 %v278
      %v334 = vunpack.c.l.b16 %v279
      %v335 = vunpack.c.l.b16 %v280
      %v336 = vunpack.c.l.b16 %v281
      %v337 = vunpack.c.l.b16 %v282
      %v338 = vunpack.c.l.b16 %v283
      %v339 = vunpack.c.l.b16 %v284
      %v340 = vunpack.c.l.b16 %v285
      %v341 = vunpack.c.l.b16 %v286
      %v342 = vunpack.c.l.b16 %v287
      %vm343 = vcmask 1041409
      %v344 = vsel %vm343, %v328, %v327
      %vm345 = vcmask 1042434
      %v346 = vsel %vm345, %v329, %v344
      %vm347 = vcmask 1043459
      %v348 = vsel %vm347, %v330, %v346
      %vm349 = vcmask 1044484
      %v350 = vsel %vm349, %v331, %v348
      %vm351 = vcmask 1045509
      %v352 = vsel %vm351, %v332, %v350
      %vm353 = vcmask 1046534
      %v354 = vsel %vm353, %v333, %v352
      %vm355 = vcmask 1047559
      %v356 = vsel %vm355, %v334, %v354
      %v357 = vsel %vm343, %v336, %v335
      %v358 = vsel %vm345, %v337, %v357
      %v359 = vsel %vm347, %v338, %v358
      %v360 = vsel %vm349, %v339, %v359
      %v361 = vsel %vm351, %v340, %v360
      %v362 = vsel %vm353, %v341, %v361
      %v363 = vsel %vm355, %v342, %v362
      %v364 = vpack.c.b16 %v363, %v356
      %v382 = vunpack.c.l.b16 %v288
      %v383 = vunpack.c.l.b16 %v289
      %v384 = vunpack.c.l.b16 %v290
      %v385 = vunpack.c.l.b16 %v291
      %v386 = vunpack.c.l.b16 %v292
      %v387 = vunpack.c.l.b16 %v293
      %v388 = vunpack.c.l.b16 %v294
      %v389 = vunpack.c.l.b16 %v295
      %v390 = vunpack.c.l.b16 %v296
      %v391 = vunpack.c.l.b16 %v297
      %v392 = vunpack.c.l.b16 %v298
      %v393 = vunpack.c.l.b16 %v299
      %v394 = vunpack.c.l.b16 %v300
      %v395 = vunpack.c.l.b16 %v301
      %v396 = vunpack.c.l.b16 %v302
      %v397 = vunpack.c.l.b16 %v303
      %v398 = vpack.c.b16 %v383, %v382
      %v399 = vpack.c.b16 %v385, %v384
      %v400 = vpack.c.b16 %v387, %v386
      %v401 = vpack.c.b16 %v389, %v388
      %v402 = vpack.c.b16 %v391, %v390
      %v403 = vpack.c.b16 %v393, %v392
      %v404 = vpack.c.b16 %v395, %v394
      %v405 = vpack.c.b16 %v397, %v396
      %414 = vmatprep.subr.bf16.mxu0 0
      %415 = vmatpush1.bf16.msra.mxu0 %v398
      %416 = vmatprep.subr.bf16.mxu0 0
      %417 = vmatpush1.bf16.msra.mxu0 %v399
      %418 = vmatprep.subr.bf16.mxu0 0
      %419 = vmatpush1.bf16.msra.mxu0 %v400
      %420 = vmatprep.subr.bf16.mxu0 0
      %421 = vmatpush1.bf16.msra.mxu0 %v401
      %422 = vmatprep.subr.bf16.mxu0 0
      %423 = vmatpush1.bf16.msra.mxu0 %v402
      %424 = vmatprep.subr.bf16.mxu0 0
      %425 = vmatpush1.bf16.msra.mxu0 %v403
      %426 = vmatprep.subr.bf16.mxu0 0
      %427 = vmatpush1.bf16.msra.mxu0 %v404
      %428 = vmatprep.subr.bf16.mxu0 0
      %429 = vmatpush1.bf16.msra.mxu0 %v405
      %430 = vmatprep.subr.bf16.mxu0 0
      %431 = vmatpush1.bf16.msra.mxu0 0
      %432 = vmatprep.subr.bf16.mxu0 0
      %433 = vmatpush1.bf16.msra.mxu0 0
      %434 = vmatprep.subr.bf16.mxu0 0
      %435 = vmatpush1.bf16.msra.mxu0 0
      %436 = vmatprep.subr.bf16.mxu0 0
      %437 = vmatpush1.bf16.msra.mxu0 0
      %438 = vmatprep.subr.bf16.mxu0 0
      %439 = vmatpush1.bf16.msra.mxu0 0
      %440 = vmatprep.subr.bf16.mxu0 0
      %441 = vmatpush1.bf16.msra.mxu0 0
      %442 = vmatprep.subr.bf16.mxu0 0
      %443 = vmatpush1.bf16.msra.mxu0 0
      %444 = vmatprep.subr.bf16.mxu0 0
      %445 = vmatpush1.bf16.msra.mxu0 0
      %446 = vmatprep.mubr.bf16.mxu0 0
      %447 = vmatmul.mubr.bf16.gmra.mrb[0].mxu0 %v364
      %v448 = vpop.f32.mrb[0].mxu0
      %v449 = vadd.f32 %v309, %v448
      %v450 = vpop.f32.mrb[0].mxu0
      %v451 = vpop.f32.mrb[0].mxu0
      %v452 = vadd.f32 %v309, %v451
      %v453 = vpop.f32.mrb[0].mxu0
      %454 = vdwg.mxu0
      %v455 = vmax.f32 %v449, 0.0
      %v456 = vmax.f32 %v452, 0.0
      %v457 = vpack.c.bf16 %v456, %v455
      %s458 = scalar_lea.vmem [#allocation6], 64
      %v459 = vld [vmem:[%s458] sm:$0xf]
      %v460 = vld [vmem:[%s458 + $0x4] sm:$0xf]
      %v461 = vld [vmem:[%s458 + $0x8] sm:$0xf]
      %v462 = vld [vmem:[%s458 + $0xc] sm:$0xf]
      %v463 = vld [vmem:[%s458 + $0x10] sm:$0xf]
      %v464 = vld [vmem:[%s458 + $0x14] sm:$0xf]
      %v465 = vld [vmem:[%s458 + $0x18] sm:$0xf]
      %v466 = vld [vmem:[%s458 + $0x1c] sm:$0xf]
      %v467 = vld [vmem:[%s458 + $0x20] sm:$0xf]
      %v468 = vld [vmem:[%s458 + $0x24] sm:$0xf]
      %v469 = vld [vmem:[%s458 + $0x28] sm:$0xf]
      %v470 = vld [vmem:[%s458 + $0x2c] sm:$0xf]
      %v471 = vld [vmem:[%s458 + $0x30] sm:$0xf]
      %v472 = vld [vmem:[%s458 + $0x34] sm:$0xf]
      %v473 = vld [vmem:[%s458 + $0x38] sm:$0xf]
      %v474 = vld [vmem:[%s458 + $0x3c] sm:$0xf]
      %s475 = scalar_lea.vmem [#allocation8], 1
      %v476 = vld [vmem:[%s475] sm:$0x1]
      %v478 = vlaneseq
      %v479 = vshrl.u32 %v478, 7
      %v480 = vsub.s32 0, %v479
      %v481 = vrot.slane %v476, %v480
      %v499 = vunpack.c.l.b16 %v459
      %v500 = vunpack.c.l.b16 %v460
      %v501 = vunpack.c.l.b16 %v461
      %v502 = vunpack.c.l.b16 %v462
      %v503 = vunpack.c.l.b16 %v463
      %v504 = vunpack.c.l.b16 %v464
      %v505 = vunpack.c.l.b16 %v465
      %v506 = vunpack.c.l.b16 %v466
      %v507 = vunpack.c.l.b16 %v467
      %v508 = vunpack.c.l.b16 %v468
      %v509 = vunpack.c.l.b16 %v469
      %v510 = vunpack.c.l.b16 %v470
      %v511 = vunpack.c.l.b16 %v471
      %v512 = vunpack.c.l.b16 %v472
      %v513 = vunpack.c.l.b16 %v473
      %v514 = vunpack.c.l.b16 %v474
      %v515 = vpack.c.b16 %v500, %v499
      %v516 = vpack.c.b16 %v502, %v501
      %v517 = vpack.c.b16 %v504, %v503
      %v518 = vpack.c.b16 %v506, %v505
      %v519 = vpack.c.b16 %v508, %v507
      %v520 = vpack.c.b16 %v510, %v509
      %v521 = vpack.c.b16 %v512, %v511
      %v522 = vpack.c.b16 %v514, %v513
      %531 = vmatprep.subr.bf16.mxu0 0
      %532 = vmatpush1.bf16.msra.mxu0 %v515
      %533 = vmatprep.subr.bf16.mxu0 0
      %534 = vmatpush1.bf16.msra.mxu0 %v516
      %535 = vmatprep.subr.bf16.mxu0 0
      %536 = vmatpush1.bf16.msra.mxu0 %v517
      %537 = vmatprep.subr.bf16.mxu0 0
      %538 = vmatpush1.bf16.msra.mxu0 %v518
      %539 = vmatprep.subr.bf16.mxu0 0
      %540 = vmatpush1.bf16.msra.mxu0 %v519
      %541 = vmatprep.subr.bf16.mxu0 0
      %542 = vmatpush1.bf16.msra.mxu0 %v520
      %543 = vmatprep.subr.bf16.mxu0 0
      %544 = vmatpush1.bf16.msra.mxu0 %v521
      %545 = vmatprep.subr.bf16.mxu0 0
      %546 = vmatpush1.bf16.msra.mxu0 %v522
      %547 = vmatprep.subr.bf16.mxu0 0
      %548 = vmatpush1.bf16.msra.mxu0 0
      %549 = vmatprep.subr.bf16.mxu0 0
      %550 = vmatpush1.bf16.msra.mxu0 0
      %551 = vmatprep.subr.bf16.mxu0 0
      %552 = vmatpush1.bf16.msra.mxu0 0
      %553 = vmatprep.subr.bf16.mxu0 0
      %554 = vmatpush1.bf16.msra.mxu0 0
      %555 = vmatprep.subr.bf16.mxu0 0
      %556 = vmatpush1.bf16.msra.mxu0 0
      %557 = vmatprep.subr.bf16.mxu0 0
      %558 = vmatpush1.bf16.msra.mxu0 0
      %559 = vmatprep.subr.bf16.mxu0 0
      %560 = vmatpush1.bf16.msra.mxu0 0
      %561 = vmatprep.subr.bf16.mxu0 0
      %562 = vmatpush1.bf16.msra.mxu0 0
      %563 = vmatprep.mubr.bf16.mxu0 0
      %564 = vmatmul.mubr.bf16.gmra.mrb[0].mxu0 %v457
      %v565 = vpop.f32.mrb[0].mxu0
      %v566 = vadd.f32 %v481, %v565
      %v567 = vpop.f32.mrb[0].mxu0
      %v568 = vpop.f32.mrb[0].mxu0
      %v569 = vadd.f32 %v481, %v568
      %v570 = vpop.f32.mrb[0].mxu0
      %571 = vdwg.mxu0
      %v572 = vmax.f32 %v566, 0.0
      %v573 = vmax.f32 %v569, 0.0
      %v574 = vpack.c.bf16 %v573, %v572
      %s575 = scalar_lea.vmem [#allocation6], 128
      %v576 = vld [vmem:[%s575] sm:$0xf]
      %v577 = vld [vmem:[%s575 + $0x4] sm:$0xf]
      %v578 = vld [vmem:[%s575 + $0x8] sm:$0xf]
      %v579 = vld [vmem:[%s575 + $0xc] sm:$0xf]
      %v580 = vld [vmem:[%s575 + $0x10] sm:$0xf]
      %v581 = vld [vmem:[%s575 + $0x14] sm:$0xf]
      %v582 = vld [vmem:[%s575 + $0x18] sm:$0xf]
      %v583 = vld [vmem:[%s575 + $0x1c] sm:$0xf]
      %v584 = vld [vmem:[%s575 + $0x20] sm:$0xf]
      %v585 = vld [vmem:[%s575 + $0x24] sm:$0xf]
      %v586 = vld [vmem:[%s575 + $0x28] sm:$0xf]
      %v587 = vld [vmem:[%s575 + $0x2c] sm:$0xf]
      %v588 = vld [vmem:[%s575 + $0x30] sm:$0xf]
      %v589 = vld [vmem:[%s575 + $0x34] sm:$0xf]
      %v590 = vld [vmem:[%s575 + $0x38] sm:$0xf]
      %v591 = vld [vmem:[%s575 + $0x3c] sm:$0xf]
      %s592 = scalar_lea.vmem [#allocation8], 2
      %v593 = vld [vmem:[%s592] sm:$0x1]
      %v595 = vlaneseq
      %v596 = vshrl.u32 %v595, 7
      %v597 = vsub.s32 0, %v596
      %v598 = vrot.slane %v593, %v597
      %v616 = vunpack.c.l.b16 %v576
      %v617 = vunpack.c.l.b16 %v577
      %v618 = vunpack.c.l.b16 %v578
      %v619 = vunpack.c.l.b16 %v579
      %v620 = vunpack.c.l.b16 %v580
      %v621 = vunpack.c.l.b16 %v581
      %v622 = vunpack.c.l.b16 %v582
      %v623 = vunpack.c.l.b16 %v583
      %v624 = vunpack.c.l.b16 %v584
      %v625 = vunpack.c.l.b16 %v585
      %v626 = vunpack.c.l.b16 %v586
      %v627 = vunpack.c.l.b16 %v587
      %v628 = vunpack.c.l.b16 %v588
      %v629 = vunpack.c.l.b16 %v589
      %v630 = vunpack.c.l.b16 %v590
      %v631 = vunpack.c.l.b16 %v591
      %v632 = vpack.c.b16 %v617, %v616
      %v633 = vpack.c.b16 %v619, %v618
      %v634 = vpack.c.b16 %v621, %v620
      %v635 = vpack.c.b16 %v623, %v622
      %v636 = vpack.c.b16 %v625, %v624
      %v637 = vpack.c.b16 %v627, %v626
      %v638 = vpack.c.b16 %v629, %v628
      %v639 = vpack.c.b16 %v631, %v630
      %648 = vmatprep.subr.bf16.mxu0 0
      %649 = vmatpush1.bf16.msra.mxu0 %v632
      %650 = vmatprep.subr.bf16.mxu0 0
      %651 = vmatpush1.bf16.msra.mxu0 %v633
      %652 = vmatprep.subr.bf16.mxu0 0
      %653 = vmatpush1.bf16.msra.mxu0 %v634
      %654 = vmatprep.subr.bf16.mxu0 0
      %655 = vmatpush1.bf16.msra.mxu0 %v635
      %656 = vmatprep.subr.bf16.mxu0 0
      %657 = vmatpush1.bf16.msra.mxu0 %v636
      %658 = vmatprep.subr.bf16.mxu0 0
      %659 = vmatpush1.bf16.msra.mxu0 %v637
      %660 = vmatprep.subr.bf16.mxu0 0
      %661 = vmatpush1.bf16.msra.mxu0 %v638
      %662 = vmatprep.subr.bf16.mxu0 0
      %663 = vmatpush1.bf16.msra.mxu0 %v639
      %664 = vmatprep.subr.bf16.mxu0 0
      %665 = vmatpush1.bf16.msra.mxu0 0
      %666 = vmatprep.subr.bf16.mxu0 0
      %667 = vmatpush1.bf16.msra.mxu0 0
      %668 = vmatprep.subr.bf16.mxu0 0
      %669 = vmatpush1.bf16.msra.mxu0 0
      %670 = vmatprep.subr.bf16.mxu0 0
      %671 = vmatpush1.bf16.msra.mxu0 0
      %672 = vmatprep.subr.bf16.mxu0 0
      %673 = vmatpush1.bf16.msra.mxu0 0
      %674 = vmatprep.subr.bf16.mxu0 0
      %675 = vmatpush1.bf16.msra.mxu0 0
      %676 = vmatprep.subr.bf16.mxu0 0
      %677 = vmatpush1.bf16.msra.mxu0 0
      %678 = vmatprep.subr.bf16.mxu0 0
      %679 = vmatpush1.bf16.msra.mxu0 0
      %680 = vmatprep.mubr.bf16.mxu0 0
      %681 = vmatmul.mubr.bf16.gmra.mrb[0].mxu0 %v574
      %v682 = vpop.f32.mrb[0].mxu0
      %v683 = vadd.f32 %v598, %v682
      %v684 = vpop.f32.mrb[0].mxu0
      %v685 = vpop.f32.mrb[0].mxu0
      %v686 = vadd.f32 %v598, %v685
      %v687 = vpop.f32.mrb[0].mxu0
      %688 = vdwg.mxu0
      %v689 = vmax.f32 %v683, 0.0
      %v690 = vmax.f32 %v686, 0.0
      %v691 = vpack.c.bf16 %v690, %v689
      %s692 = scalar_lea.vmem [#allocation6], 192
      %v693 = vld [vmem:[%s692] sm:$0xf]
      %v694 = vld [vmem:[%s692 + $0x4] sm:$0xf]
      %v695 = vld [vmem:[%s692 + $0x8] sm:$0xf]
      %v696 = vld [vmem:[%s692 + $0xc] sm:$0xf]
      %v697 = vld [vmem:[%s692 + $0x10] sm:$0xf]
      %v698 = vld [vmem:[%s692 + $0x14] sm:$0xf]
      %v699 = vld [vmem:[%s692 + $0x18] sm:$0xf]
      %v700 = vld [vmem:[%s692 + $0x1c] sm:$0xf]
      %v701 = vld [vmem:[%s692 + $0x20] sm:$0xf]
      %v702 = vld [vmem:[%s692 + $0x24] sm:$0xf]
      %v703 = vld [vmem:[%s692 + $0x28] sm:$0xf]
      %v704 = vld [vmem:[%s692 + $0x2c] sm:$0xf]
      %v705 = vld [vmem:[%s692 + $0x30] sm:$0xf]
      %v706 = vld [vmem:[%s692 + $0x34] sm:$0xf]
      %v707 = vld [vmem:[%s692 + $0x38] sm:$0xf]
      %v708 = vld [vmem:[%s692 + $0x3c] sm:$0xf]
      %s709 = scalar_lea.vmem [#allocation8], 3
      %v710 = vld [vmem:[%s709] sm:$0x1]
      %v712 = vlaneseq
      %v713 = vshrl.u32 %v712, 7
      %v714 = vsub.s32 0, %v713
      %v715 = vrot.slane %v710, %v714
      %v733 = vunpack.c.l.b16 %v693
      %v734 = vunpack.c.l.b16 %v694
      %v735 = vunpack.c.l.b16 %v695
      %v736 = vunpack.c.l.b16 %v696
      %v737 = vunpack.c.l.b16 %v697
      %v738 = vunpack.c.l.b16 %v698
      %v739 = vunpack.c.l.b16 %v699
      %v740 = vunpack.c.l.b16 %v700
      %v741 = vunpack.c.l.b16 %v701
      %v742 = vunpack.c.l.b16 %v702
      %v743 = vunpack.c.l.b16 %v703
      %v744 = vunpack.c.l.b16 %v704
      %v745 = vunpack.c.l.b16 %v705
      %v746 = vunpack.c.l.b16 %v706
      %v747 = vunpack.c.l.b16 %v707
      %v748 = vunpack.c.l.b16 %v708
      %v749 = vpack.c.b16 %v734, %v733
      %v750 = vpack.c.b16 %v736, %v735
      %v751 = vpack.c.b16 %v738, %v737
      %v752 = vpack.c.b16 %v740, %v739
      %v753 = vpack.c.b16 %v742, %v741
      %v754 = vpack.c.b16 %v744, %v743
      %v755 = vpack.c.b16 %v746, %v745
      %v756 = vpack.c.b16 %v748, %v747
      %765 = vmatprep.subr.bf16.mxu0 0
      %766 = vmatpush1.bf16.msra.mxu0 %v749
      %767 = vmatprep.subr.bf16.mxu0 0
      %768 = vmatpush1.bf16.msra.mxu0 %v750
      %769 = vmatprep.subr.bf16.mxu0 0
      %770 = vmatpush1.bf16.msra.mxu0 %v751
      %771 = vmatprep.subr.bf16.mxu0 0
      %772 = vmatpush1.bf16.msra.mxu0 %v752
      %773 = vmatprep.subr.bf16.mxu0 0
      %774 = vmatpush1.bf16.msra.mxu0 %v753
      %775 = vmatprep.subr.bf16.mxu0 0
      %776 = vmatpush1.bf16.msra.mxu0 %v754
      %777 = vmatprep.subr.bf16.mxu0 0
      %778 = vmatpush1.bf16.msra.mxu0 %v755
      %779 = vmatprep.subr.bf16.mxu0 0
      %780 = vmatpush1.bf16.msra.mxu0 %v756
      %781 = vmatprep.subr.bf16.mxu0 0
      %782 = vmatpush1.bf16.msra.mxu0 0
      %783 = vmatprep.subr.bf16.mxu0 0
      %784 = vmatpush1.bf16.msra.mxu0 0
      %785 = vmatprep.subr.bf16.mxu0 0
      %786 = vmatpush1.bf16.msra.mxu0 0
      %787 = vmatprep.subr.bf16.mxu0 0
      %788 = vmatpush1.bf16.msra.mxu0 0
      %789 = vmatprep.subr.bf16.mxu0 0
      %790 = vmatpush1.bf16.msra.mxu0 0
      %791 = vmatprep.subr.bf16.mxu0 0
      %792 = vmatpush1.bf16.msra.mxu0 0
      %793 = vmatprep.subr.bf16.mxu0 0
      %794 = vmatpush1.bf16.msra.mxu0 0
      %795 = vmatprep.subr.bf16.mxu0 0
      %796 = vmatpush1.bf16.msra.mxu0 0
      %797 = vmatprep.mubr.bf16.mxu0 0
      %798 = vmatmul.mubr.bf16.gmra.mrb[0].mxu0 %v691
      %v799 = vpop.f32.mrb[0].mxu0
      %v800 = vadd.f32 %v715, %v799
      %v801 = vpop.f32.mrb[0].mxu0
      %v802 = vpop.f32.mrb[0].mxu0
      %v803 = vadd.f32 %v715, %v802
      %v804 = vpop.f32.mrb[0].mxu0
      %805 = vdwg.mxu0
      %806 = vst [vmem:[#allocation9] sm:$0xff] %v800
      %807 = vst [vmem:[#allocation9 + $0x8] sm:$0xff] %v803
    $region33: #{embedder_model_forward.2} parent=1 // pred_fallthru
      _
    // Predicated region
    $region34: #{embedder_model_forward.2} parent=1 // pred_check
      _
    $region35: #{embedder_model_forward.2} parent=1 // pred_check_branch
      %809 = sbr.rel (0) target = $region37
    $region36: #{embedder_model_forward.2} parent=1 // pred_region
      %s811 = ssub.s32 256, 256
      %812 = vsyncadd [#allocation5], %s811
      %s813 = sshll.u32 [#allocation9], 4
      %s814 = int_to_ptr.vmem [resolvable:$true] %s813
      %819 = dma.vmem_to_hbm [thread:$0]  %s814, 256, %s3, [#allocation5], 128, 128, 8
    $region37: #{embedder_model_forward.2} parent=1 // pred_fallthru
      _
    // Predicated region
    $region38: #{embedder_model_forward.2} parent=1 // pred_check
      _
    $region39: #{embedder_model_forward.2} parent=1 // pred_check_branch
      %821 = sbr.rel (0) target = $region41
    $region40: #{embedder_model_forward.2} parent=1 // pred_region
      %822 = dma.done [#allocation5], 256
    $region41: #{embedder_model_forward.2} parent=1 // pred_fallthru
      _
    %823 = vsyncpa [#allocation4], 1
    %824 = vsyncpa [#allocation7], 1
    %825 = vsyncpa [#allocation5], 1

</llo_original>
